<compile_context>
chip_gen: v7x
topology: tpu7x:2x2x1
jax: 0.10.0
libtpu: 0.0.40
codegen_flags: <defaults>
</compile_context>

<pallas_src>
import jax
import jax.numpy as jnp
from jax.experimental import pallas as pl
from jax.experimental.pallas import tpu as pltpu


def _fused_dwsep_kernel(wf_ref, bf_ref, p_ref, out_ref):
    # wf_ref : (Tc, CKK)      fused depthwise*pointwise weights (resident)
    # bf_ref : (Tc, 1)        fused bias, f32 (resident)
    # p_ref  : (1, CKK, Ts)   im2col patch tile (lane-dense, Ts multiple of 128)
    # out_ref: (1, Tc, Ts)
    acc = jnp.dot(wf_ref[...], p_ref[0], preferred_element_type=jnp.float32)
    out_ref[0] = (acc + bf_ref[...]).astype(out_ref.dtype)


def _round_up(x, m):
    return (x + m - 1) // m * m


def _vmem_budget_bytes():
    """Per-generation VMEM budget: ~half of physical VMEM, capped at 64 MiB.
    v5e/v6e (128 MiB) -> 64 MiB; v7x (64 MiB per TC) -> 32 MiB."""
    cap = None
    try:
        cap = getattr(pltpu.get_tpu_info(), "vmem_capacity_bytes", None)
    except Exception:
        cap = None
    if not cap:
        cap = 64 * 1024 * 1024  # conservative fallback (v7x-sized)
    return int(min(cap // 2, 64 * 1024 * 1024))


def _pick_cout_tile(cout):
    """Native MXU M-tile for large Cout; single block for small Cout."""
    for t in (256, 128):
        if cout % t == 0:
            return t
    return cout


def _pick_spatial_tile(s_hw, ckk, tc, dtype_bytes, budget, n_batch):
    """Largest multiple-of-128 spatial tile whose per-step footprint fits budget."""
    s128 = _round_up(s_hw, 128)
    # Conservative per-step footprint (everything double-buffered):
    fixed = 2 * tc * ckk * dtype_bytes + 2 * tc * 4          # fused weights + f32 bias
    per_col = 2 * (ckk + tc) * dtype_bytes                   # patch tile + output tile
    ts_max = max(128, ((budget - fixed) // per_col) // 128 * 128)
    ts_max = min(ts_max, s128, 8192)  # 8192 cols already amortize ~0.35us/step overhead
    # Prefer a divisor of the 128-aligned extent (zero padding waste) unless that
    # forces a much smaller tile, in which case pad the spatial dim up instead.
    ts = ts_max
    while s128 % ts:
        ts -= 128
    if ts * 4 < ts_max and ts < 2048:
        ts = ts_max
    # Multi-TC chips (v7x) want >=2 parallel grid steps; batch normally supplies
    # them, otherwise split the spatial axis once.
    if n_batch == 1 and _round_up(s_hw, ts) // ts < 2 and s128 > 128:
        half = (s128 // 2) // 128 * 128
        if half and s128 % half == 0:
            ts = half
    return ts


def depthwise_separable_conv(x, dw_w, dw_b, pw_w, pw_b, *, stride=1, padding=0,
                             compute_dtype=None):
    """x: (N, C, H, W); dw_w: (C, 1, K, K); dw_b: (C,); pw_w: (Cout, C, 1, 1); pw_b: (Cout,)."""
    N, C, H, W = x.shape
    K = dw_w.shape[-1]
    Cout = pw_w.shape[0]
    Ho = (H + 2 * padding - K) // stride + 1
    Wo = (W + 2 * padding - K) // stride + 1
    CKK = C * K * K
    S = Ho * Wo                                   # per-image spatial extent

    cdtype = jnp.dtype(compute_dtype) if compute_dtype is not None else x.dtype
    db = jnp.dtype(cdtype).itemsize
    out_dtype = x.dtype

    # ---- wrapper glue (plain JAX): pad, im2col (NO layout transposes) --------
    xp = jnp.pad(x, ((0, 0), (0, 0), (padding, padding), (padding, padding)))
    taps = []
    for kh in range(K):
        for kw in range(K):
            taps.append(xp[:, :,
                           kh:kh + (Ho - 1) * stride + 1:stride,
                           kw:kw + (Wo - 1) * stride + 1:stride])      # (N, C, Ho, Wo)
    # stack on axis=2: (N, C, K*K, Ho, Wo) -> (N, C*K*K, Ho*Wo), pure reshape.
    patches = jnp.stack(taps, axis=2).reshape(N, CKK, S).astype(cdtype)

    # Fused weights/bias (f32 math, operands in the compute dtype; the matmul
    # accumulates in f32 via preferred_element_type).
    pw2 = pw_w.reshape(Cout, C).astype(jnp.float32)
    dw2 = dw_w.reshape(C, K * K).astype(jnp.float32)
    wf = (pw2[:, :, None] * dw2[None, :, :]).reshape(Cout, CKK).astype(cdtype)
    bf = (pw2 @ dw_b.reshape(C, 1).astype(jnp.float32)
          + pw_b.reshape(Cout, 1).astype(jnp.float32))                 # (Cout, 1) f32

    # ---- tiling: VMEM-budget-aware spatial tile, native MXU Cout tile --------
    budget = _vmem_budget_bytes()
    Tc = _pick_cout_tile(Cout)
    Ts = _pick_spatial_tile(S, CKK, Tc, db, budget, N)
    S_pad = _round_up(S, Ts)
    if S_pad != S:
        patches = jnp.pad(patches, ((0, 0), (0, 0), (0, S_pad - S)))

    grid = (N, Cout // Tc, S_pad // Ts)

    out3d = pl.pallas_call(
        _fused_dwsep_kernel,
        out_shape=jax.ShapeDtypeStruct((N, Cout, S_pad), out_dtype),
        grid_spec=pltpu.PrefetchScalarGridSpec(
            num_scalar_prefetch=0,
            grid=grid,
            in_specs=[
                pl.BlockSpec((Tc, CKK), lambda n, c, s: (c, 0)),     # fused weights
                pl.BlockSpec((Tc, 1), lambda n, c, s: (c, 0)),       # fused bias
                pl.BlockSpec((1, CKK, Ts), lambda n, c, s: (n, 0, s)),  # patch tile
            ],
            out_specs=pl.BlockSpec((1, Tc, Ts), lambda n, c, s: (n, c, s)),
        ),
        compiler_params=pltpu.CompilerParams(
            dimension_semantics=("parallel", "parallel", "parallel"),
            vmem_limit_bytes=int(budget),
        ),
    )(wf, bf, patches)

    # (N, Cout, S_pad) -> (N, Cout, Ho, Wo): free reshape (plus trim of padding).
    return out3d[:, :, :S].reshape(N, Cout, Ho, Wo)


if __name__ == "__main__":
    # Module config: DepthWiseSeparableConv(in_channels=4, out_channels=8,
    #                                       kernel_size=3, stride=1, padding=1)
    N, Cin, H, W = 2, 4, 16, 16
    Cout, K, stride, padding = 8, 3, 1, 1

    key = jax.random.PRNGKey(0)
    kx, k1, k2, k3, k4 = jax.random.split(key, 5)
    x = jax.random.normal(kx, (N, Cin, H, W), dtype=jnp.float32)
    dw_w = jax.random.normal(k1, (Cin, 1, K, K), dtype=jnp.float32) * 0.1
    dw_b = jax.random.normal(k2, (Cin,), dtype=jnp.float32) * 0.1
    pw_w = jax.random.normal(k3, (Cout, Cin, 1, 1), dtype=jnp.float32) * 0.1
    pw_b = jax.random.normal(k4, (Cout,), dtype=jnp.float32) * 0.1

    out = depthwise_separable_conv(x, dw_w, dw_b, pw_w, pw_b,
                                   stride=stride, padding=padding)
    out = jax.block_until_ready(out)

    # Reference: XLA convolutions with the same semantics as the PyTorch module.
    dw_ref = jax.lax.conv_general_dilated(
        x, dw_w, window_strides=(stride, stride),
        padding=[(padding, padding), (padding, padding)],
        dimension_numbers=("NCHW", "OIHW", "NCHW"),
        feature_group_count=Cin) + dw_b[None, :, None, None]
    ref = jax.lax.conv_general_dilated(
        dw_ref, pw_w, window_strides=(1, 1), padding="VALID",
        dimension_numbers=("NCHW", "OIHW", "NCHW")) + pw_b[None, :, None, None]

    assert out.shape == (N, Cout, H, W), out.shape
    assert jnp.allclose(out, ref, atol=1e-4, rtol=1e-4), float(jnp.abs(out - ref).max())
    print("KERNEL_OK")
</pallas_src>

<mosaic_0001>
module attributes {stable_mosaic.version = 11 : i64} {
  func.func @_fused_dwsep_kernel(%arg0: i32, %arg1: i32, %arg2: i32, %arg3: memref<8x36xf32, #tpu.memory_space<vmem>>, %arg4: memref<8x1xf32, #tpu.memory_space<vmem>>, %arg5: memref<1x36x256xf32, #tpu.memory_space<vmem>>, %arg6: memref<1x8x256xf32, #tpu.memory_space<vmem>>) attributes {dimension_semantics = [#tpu.dimension_semantics<parallel>, #tpu.dimension_semantics<parallel>, #tpu.dimension_semantics<parallel>], iteration_bounds = array<i64: 2, 1, 1>, scalar_prefetch = 0 : i64, scratch_operands = 0 : i64, tpu.core_type = #tpu.core_type<tc>, window_params = [{transform_indices = @transform_0, window_bounds = array<i64: 8, 36>}, {transform_indices = @transform_1, window_bounds = array<i64: 8, 1>}, {transform_indices = @transform_2, window_bounds = array<i64: 1, 36, 256>}, {transform_indices = @transform_3, window_bounds = array<i64: 1, 8, 256>}]} {
    %c0 = arith.constant 0 : index
    %c0_0 = arith.constant 0 : index
    %0 = vector.load %arg3[%c0, %c0_0] : memref<8x36xf32, #tpu.memory_space<vmem>>, vector<8x36xf32>
    %c0_1 = arith.constant 0 : index
    %c0_2 = arith.constant 0 : index
    %c0_3 = arith.constant 0 : index
    %1 = vector.load %arg5[%c0_1, %c0_2, %c0_3] : memref<1x36x256xf32, #tpu.memory_space<vmem>>, vector<1x36x256xf32>
    %2 = vector.shape_cast %1 : vector<1x36x256xf32> to vector<36x256xf32>
    %cst = arith.constant dense<0.000000e+00> : vector<8x256xf32>
    %3 = tpu.matmul %0, %2, %cst {dimension_numbers = #tpu.dot_dimension_numbers<[1], [0], [0], [1], [0, 0, 1, 1], [], []>} : vector<8x36xf32>, vector<36x256xf32>, vector<8x256xf32> -> vector<8x256xf32>
    %c0_4 = arith.constant 0 : index
    %c0_5 = arith.constant 0 : index
    %4 = vector.load %arg4[%c0_4, %c0_5] : memref<8x1xf32, #tpu.memory_space<vmem>>, vector<8x1xf32>
    %5 = vector.broadcast %4 : vector<8x1xf32> to vector<8x256xf32>
    %6 = arith.addf %3, %5 : vector<8x256xf32>
    %c0_6 = arith.constant 0 : index
    %c0_7 = arith.constant 0 : index
    %c0_8 = arith.constant 0 : index
    %7 = vector.load %arg6[%c0_6, %c0_7, %c0_8] : memref<1x8x256xf32, #tpu.memory_space<vmem>>, vector<1x8x256xf32>
    %8 = vector.shape_cast %7 : vector<1x8x256xf32> to vector<8x256xf32>
    %9 = vector.shape_cast %6 : vector<8x256xf32> to vector<1x8x256xf32>
    tpu.vector_store %arg6[%c0_6, %c0_7, %c0_8], %9 {strides = array<i32>} : memref<1x8x256xf32, #tpu.memory_space<vmem>>, vector<1x8x256xf32>,
    return
  }
  func.func @transform_0(%arg0: i32, %arg1: i32, %arg2: i32) -> (i32, i32) {
    %c0_i32 = arith.constant 0 : i32
    %c0_i32_0 = arith.constant 0 : i32
    return %arg1, %c0_i32 : i32, i32
  }
  func.func @transform_1(%arg0: i32, %arg1: i32, %arg2: i32) -> (i32, i32) {
    %c0_i32 = arith.constant 0 : i32
    %c0_i32_0 = arith.constant 0 : i32
    return %arg1, %c0_i32 : i32, i32
  }
  func.func @transform_2(%arg0: i32, %arg1: i32, %arg2: i32) -> (i32, i32, i32) {
    %c0_i32 = arith.constant 0 : i32
    %c0_i32_0 = arith.constant 0 : i32
    return %arg0, %c0_i32, %arg2 : i32, i32, i32
  }
  func.func @transform_3(%arg0: i32, %arg1: i32, %arg2: i32) -> (i32, i32, i32) {
    %c0_i32 = arith.constant 0 : i32
    return %arg0, %arg1, %arg2 : i32, i32, i32
  }
}

</mosaic_0001>

<llo_original>
// kernel: tpu_custom_call.1
$region0: #{tpu_custom_call.1}
  #allocation0 [shape = 'u32[]', space=smem, size = 0x4, offset = 0x4, fixed_abs, tag = 'smem constant byte address 0x4 - core index']
  #allocation1 [shape = 'u32[144,128]{1,0:T(1,128)}', space=vmem, size = 0x12000, scoped, tag = 'internal scratch']
  %s0 = inlined_call_operand.vmem [shape: f32[8,36], index: 0, kind: input, shape index: {}]
  %s1 = inlined_call_operand.vmem [shape: f32[8,1], index: 1, kind: input, shape index: {}]
  %s2 = inlined_call_operand.vmem [shape: f32[2,36,256], index: 2, kind: input, shape index: {}]
  %s3 = inlined_call_operand.hbm [shape: f32[2,8,256], index: 3, kind: output, shape index: {}]
  %s4 = sld [smem:[#allocation0]]
  $region45: #{tpu_custom_call.1} parent=0
    _
  %s6 = ssub.s32 1, %s4
  %s7 = scalar_select 0, %s6, %s4
  $region1: #{tpu_custom_call.1} parent=0
    #allocation2 [shape = 'u8[16384]{0}', space=vmem, size = 0x4000, scoped, tag = 'output window, operand 0']
    #allocation3 [shape = 's32[2]{0}', space=sflag, size = 0x8, scoped, tag = 'scoped memory for tpu_custom_call.1']
    %8 = vsyncpa [#allocation3], 0
    %s9 = scalar_lea.sflag [#allocation3], 1
    %10 = vsyncpa %s9, 0
    loop: start=0, step=1, limit=4
    $region2: #{tpu_custom_call.1} parent=1 // loop_pre_header
      _
    $region3: #{tpu_custom_call.1} parent=1 // loop_header
      %s12 = sphi 0, %s16
      %p13 = scmp.ge.s32.totalorder %s12, 4
      %s19 = sphi 0, %s38
      %s20 = sphi 0, %s34
      %s21 = sphi 0, %s30
      %s22 = sphi 0, %s19
      %s23 = sphi 0, %s20
      %s24 = sphi 0, %s21
      %s25 = sphi 0, %s22
      %s26 = sphi 0, %s23
      %s27 = sphi 0, %s24
      %s41 = sphi 0, %s43
      %s44 = sphi 0, %s41
      %s45 = sphi 0, %s44
      %s61 = sphi 0, %s45
      %s67 = sphi 0, %s69
      %s70 = sphi 0, %s67
      %s71 = sphi 0, %s70
      %s87 = sphi 0, %s71
      %s95 = sphi 0, %s97
      %s98 = sphi 0, %s95
      %s99 = sphi 0, %s98
      %s115 = sphi 0, %s99
      %s125 = sphi 0, %s127
      %s128 = sphi 0, %s125
      %s129 = sphi 0, %s128
      %s145 = sphi 0, %s129
    $region4: #{tpu_custom_call.1} parent=1 // loop_header_branch
      %15 = sbr.rel (%p13) target = $region8
    $region5: #{tpu_custom_call.1} parent=1 // loop_body
      %s17 = ssub.s32 %s12, 1
      %s18 = ssub.s32 %s12, 2
      %s28 = sadd.s32 1, %s21
      %p29 = scmp.ge.s32.totalorder %s28, 1
      %s30 = scalar_select %p29, 0, %s28
      %s31 = sadd.s32 1, %s20
      %s32 = scalar_select %p29, %s31, %s20
      %p33 = scmp.ge.s32.totalorder %s32, 1
      %s34 = scalar_select %p33, 0, %s32
      %s35 = sadd.s32 1, %s19
      %s36 = scalar_select %p33, %s35, %s19
      %p37 = scmp.ge.s32.totalorder %s36, 2
      %s38 = scalar_select %p37, 0, %s36
      %s39 = ssub.s32 %s20, %s34
      %p40 = scmp.eq.s32.totalorder %s39, 0
      %s42 = sadd.s32 %s41, 1
      %s43 = scalar_select %p40, %s41, %s42
      %p46 = pneg %p40
      %p47 = scmp.eq.s32.totalorder %s12, 1
      %p48 = por %p46, %p47
      %p49 = scmp.ne.s32.totalorder %s41, %s44
      %p50 = scmp.eq.s32.totalorder %s12, 0
      %p51 = por %p49, %p50
      %p52 = scmp.ne.s32.totalorder %s41, %s44
      %p53 = scmp.eq.s32.totalorder %s17, 1
      %p54 = por %p52, %p53
      %p55 = scmp.ne.s32.totalorder %s44, %s45
      %p56 = scmp.eq.s32.totalorder %s17, 0
      %p57 = por %p55, %p56
      %p58 = scmp.ne.s32.totalorder %s44, %s45
      %p59 = scmp.eq.s32.totalorder %s18, 1
      %p60 = por %p58, %p59
      %p62 = scmp.ne.s32.totalorder %s45, %s61
      %p63 = scmp.eq.s32.totalorder %s18, 0
      %p64 = por %p62, %p63
      %s65 = ssub.s32 %s20, %s34
      %p66 = scmp.eq.s32.totalorder %s65, 0
      %s68 = sadd.s32 %s67, 1
      %s69 = scalar_select %p66, %s67, %s68
      %p72 = pneg %p66
      %p73 = scmp.eq.s32.totalorder %s12, 1
      %p74 = por %p72, %p73
      %p75 = scmp.ne.s32.totalorder %s67, %s70
      %p76 = scmp.eq.s32.totalorder %s12, 0
      %p77 = por %p75, %p76
      %p78 = scmp.ne.s32.totalorder %s67, %s70
      %p79 = scmp.eq.s32.totalorder %s17, 1
      %p80 = por %p78, %p79
      %p81 = scmp.ne.s32.totalorder %s70, %s71
      %p82 = scmp.eq.s32.totalorder %s17, 0
      %p83 = por %p81, %p82
      %p84 = scmp.ne.s32.totalorder %s70, %s71
      %p85 = scmp.eq.s32.totalorder %s18, 1
      %p86 = por %p84, %p85
      %p88 = scmp.ne.s32.totalorder %s71, %s87
      %p89 = scmp.eq.s32.totalorder %s18, 0
      %p90 = por %p88, %p89
      %s91 = ssub.s32 %s19, %s38
      %s92 = ssub.s32 %s21, %s30
      %s93 = sor.u32 %s91, %s92
      %p94 = scmp.eq.s32.totalorder %s93, 0
      %s96 = sadd.s32 %s95, 1
      %s97 = scalar_select %p94, %s95, %s96
      %p100 = pneg %p94
      %p101 = scmp.eq.s32.totalorder %s12, 1
      %p102 = por %p100, %p101
      %p103 = scmp.ne.s32.totalorder %s95, %s98
      %p104 = scmp.eq.s32.totalorder %s12, 0
      %p105 = por %p103, %p104
      %p106 = scmp.ne.s32.totalorder %s95, %s98
      %p107 = scmp.eq.s32.totalorder %s17, 1
      %p108 = por %p106, %p107
      %p109 = scmp.ne.s32.totalorder %s98, %s99
      %p110 = scmp.eq.s32.totalorder %s17, 0
      %p111 = por %p109, %p110
      %p112 = scmp.ne.s32.totalorder %s98, %s99
      %p113 = scmp.eq.s32.totalorder %s18, 1
      %p114 = por %p112, %p113
      %p116 = scmp.ne.s32.totalorder %s99, %s115
      %p117 = scmp.eq.s32.totalorder %s18, 0
      %p118 = por %p116, %p117
      %s119 = ssub.s32 %s19, %s38
      %s120 = ssub.s32 %s20, %s34
      %s121 = sor.u32 %s119, %s120
      %s122 = ssub.s32 %s21, %s30
      %s123 = sor.u32 %s121, %s122
      %p124 = scmp.eq.s32.totalorder %s123, 0
      %s126 = sadd.s32 %s125, 1
      %s127 = scalar_select %p124, %s125, %s126
      %p130 = pneg %p124
      %p131 = scmp.eq.s32.totalorder %s12, 1
      %p132 = por %p130, %p131
      %p133 = scmp.ne.s32.totalorder %s125, %s128
      %p134 = scmp.eq.s32.totalorder %s12, 0
      %p135 = por %p133, %p134
      %p136 = scmp.ne.s32.totalorder %s125, %s128
      %p137 = scmp.eq.s32.totalorder %s17, 1
      %p138 = por %p136, %p137
      %p139 = scmp.ne.s32.totalorder %s128, %s129
      %p140 = scmp.eq.s32.totalorder %s17, 0
      %p141 = por %p139, %p140
      %p142 = scmp.ne.s32.totalorder %s128, %s129
      %p143 = scmp.eq.s32.totalorder %s18, 1
      %p144 = por %p142, %p143
      %p146 = scmp.ne.s32.totalorder %s129, %s145
      %p147 = scmp.eq.s32.totalorder %s18, 0
      %p148 = por %p146, %p147
      %p149 = scmp.le.s32.totalorder 1, %s12
      %p150 = scmp.lt.s32.totalorder %s12, 3
      %p151 = pnand %p149, %p150
      %p152 = pneg %p151
      // Predicated region
      $region9: #{tpu_custom_call.1} parent=5 // pred_check
        _
      $region10: #{tpu_custom_call.1} parent=5 // pred_check_branch
        %154 = sbr.rel (%p151) target = $region12
      $region11: #{tpu_custom_call.1} parent=5 // pred_region
        %s155 = ssub.s32 %s12, 1
        // Predicated region
        $region13: #{tpu_custom_call.1} parent=11 // pred_check
          %p156 = pneg %p57
        $region14: #{tpu_custom_call.1} parent=11 // pred_check_branch
          %158 = sbr.rel (%p156) target = $region16
        $region15: #{tpu_custom_call.1} parent=11 // pred_region
          %p159 = scmp.lt.s32.totalorder %s23, 0
          %s160 = scalar_select %p159, %s23, 0
          %s161 = smul.addr %s160, 8
          %s162 = scalar_lea.vmem %s0, %s161
        $region16: #{tpu_custom_call.1} parent=11 // pred_fallthru
          _
        // Predicated region
        $region17: #{tpu_custom_call.1} parent=11 // pred_check
          %p163 = pneg %p83
        $region18: #{tpu_custom_call.1} parent=11 // pred_check_branch
          %165 = sbr.rel (%p163) target = $region20
        $region19: #{tpu_custom_call.1} parent=11 // pred_region
          %p166 = scmp.lt.s32.totalorder %s23, 0
          %s167 = scalar_select %p166, %s23, 0
          %s168 = smul.addr %s167, 8
          %s169 = scalar_lea.vmem %s1, %s168
        $region20: #{tpu_custom_call.1} parent=11 // pred_fallthru
          _
      $region12: #{tpu_custom_call.1} parent=5 // pred_fallthru
        _
      %p170 = scmp.lt.s32.totalorder %s12, 2
      // Predicated region
      $region21: #{tpu_custom_call.1} parent=5 // pred_check
        %p171 = pneg %p170
      $region22: #{tpu_custom_call.1} parent=5 // pred_check_branch
        %173 = sbr.rel (%p171) target = $region24
      $region23: #{tpu_custom_call.1} parent=5 // pred_region
        // Predicated region
        $region25: #{tpu_custom_call.1} parent=23 // pred_check
          %p174 = pneg %p105
        $region26: #{tpu_custom_call.1} parent=23 // pred_check_branch
          %176 = sbr.rel (%p174) target = $region28
        $region27: #{tpu_custom_call.1} parent=23 // pred_region
          %s177 = smul.u32 2, %s21
          %p178 = scmp.lt.s32.totalorder %s19, 1
          %s179 = scalar_select %p178, %s19, 1
          %p180 = scmp.lt.s32.totalorder %s177, 1
          %s181 = scalar_select %p180, %s177, 1
          %s182 = smul.addr %s179, 10
          %s183 = sadd.s32 %s181, %s182
          %s184 = smul.addr %s183, 8
          %s185 = scalar_lea.vmem %s2, %s184
          %s186 = smul.u32 2, %s21
        $region28: #{tpu_custom_call.1} parent=23 // pred_fallthru
          _
      $region24: #{tpu_custom_call.1} parent=5 // pred_fallthru
        _
      %p187 = scmp.le.s32.totalorder 1, %s12
      %p188 = scmp.lt.s32.totalorder %s12, 3
      %p189 = pnand %p187, %p188
      %p190 = pneg %p189
      // Predicated region
      $region29: #{tpu_custom_call.1} parent=5 // pred_check
        _
      $region30: #{tpu_custom_call.1} parent=5 // pred_check_branch
        %192 = sbr.rel (%p189) target = $region32
      $region31: #{tpu_custom_call.1} parent=5 // pred_region
        %s193 = ssub.s32 %s12, 1
        %p194 = scmp.lt.s32.totalorder %s23, 0
        %s195 = scalar_select %p194, %s23, 0
        %s196 = smul.addr %s195, 8
        %s197 = scalar_lea.vmem %s0, %s196
        %p198 = pneg %p57
        %p199 = pneg %p54
        %p200 = scmp.lt.s32.totalorder %s23, 0
        %s201 = scalar_select %p200, %s23, 0
        %s202 = smul.addr %s201, 8
        %s203 = scalar_lea.vmem %s1, %s202
        %p204 = pneg %p83
        %p205 = pneg %p80
        %s206 = smul.u32 2, %s24
        %p207 = scmp.lt.s32.totalorder %s22, 1
        %s208 = scalar_select %p207, %s22, 1
        %p209 = scmp.lt.s32.totalorder %s206, 1
        %s210 = scalar_select %p209, %s206, 1
        %s211 = smul.addr %s208, 10
        %s212 = sadd.s32 %s210, %s211
        %s213 = smul.addr %s212, 8
        %s214 = scalar_lea.vmem %s2, %s213
        %p215 = pneg %p111
        %p216 = pneg %p108
        %p217 = pneg %p141
        %p218 = pneg %p138
        %s219 = sand.u32 %s128, 1
        %s220 = scalar_lea.sflag [#allocation3], %s219
        %s221 = sand.u32 %s128, 1
        %s222 = smul.addr %s221, 16
        %s223 = scalar_lea.vmem [#allocation2], %s222
        %p224 = scmp.lt.s32.totalorder %s23, 0
        %s225 = scalar_select %p224, %s23, 0
        %s226 = smul.addr %s225, 8
        %s227 = scalar_lea.vmem %s0, %s226
        %p228 = scmp.lt.s32.totalorder %s23, 0
        %s229 = scalar_select %p228, %s23, 0
        %s230 = smul.addr %s229, 8
        %s231 = scalar_lea.vmem %s1, %s230
        %s232 = smul.u32 2, %s24
        %p233 = scmp.lt.s32.totalorder %s22, 1
        %s234 = scalar_select %p233, %s22, 1
        %p235 = scmp.lt.s32.totalorder %s232, 1
        %s236 = scalar_select %p235, %s232, 1
        %s237 = smul.addr %s234, 10
        %s238 = sadd.s32 %s236, %s237
        %s239 = smul.addr %s238, 8
        %s240 = scalar_lea.vmem %s2, %s239
        %s241 = smul.u32 2, %s24
        %s242 = smul.u32 2, %s24
        %v243 = vld [vmem:[%s227] sm:$0xff]
        %v244 = vld [vmem:[%s240] sm:$0xff]
        %v245 = vld [vmem:[%s240 + $0x8] sm:$0xff]
        %v246 = vld [vmem:[%s240 + $0x10] sm:$0xff]
        %v247 = vld [vmem:[%s240 + $0x18] sm:$0xff]
        %v248 = vld [vmem:[%s240 + $0x20] sm:$0xff]
        %v249 = vld [vmem:[%s240 + $0x28] sm:$0xff]
        %v250 = vld [vmem:[%s240 + $0x30] sm:$0xff]
        %v251 = vld [vmem:[%s240 + $0x38] sm:$0xff]
        %v252 = vld [vmem:[%s240 + $0x40] sm:$0xf]
        %v253 = vld [vmem:[%s240 + $0x48] sm:$0xf]
        %v254 = vld [vmem:[%s231] sm:$0xff]
        %256 = vset.pattern.permute.xlu0 0
        %257 = vperm.xlu0 %256, %v254
        %v258 = vpop.permute.xlu0 %257
        %vm260 = vcmask 293888
        %v262 = vsel %vm260, %v243, 0
        %vm264 = vcmask 1043456
        %v266 = vsel %vm264, %v252, 0
        %v269 = vsel %vm264, %v253, 0
        %271 = vmatprep.subr.mxu0 %v245
        %272 = vmatpush1.msra.mxu0 %v244
        %273 = vmatprep.subr.mxu0 %v247
        %274 = vmatpush1.msra.mxu0 %v246
        %275 = vmatprep.subr.mxu0 %v249
        %276 = vmatpush1.msra.mxu0 %v248
        %277 = vmatprep.subr.mxu0 %v251
        %278 = vmatpush1.msra.mxu0 %v250
        %279 = vmatprep.subr.mxu0 %v269
        %280 = vmatpush1.msra.mxu0 %v266
        %281 = vmatprep.subr.mxu0 0.0
        %282 = vmatpush1.msra.mxu0 0.0
        %283 = vmatprep.subr.mxu0 0.0
        %284 = vmatpush1.msra.mxu0 0.0
        %285 = vmatprep.subr.mxu0 0.0
        %286 = vmatpush1.msra.mxu0 0.0
        %287 = vmatprep.subr.mxu0 0.0
        %288 = vmatpush1.msra.mxu0 0.0
        %289 = vmatprep.subr.mxu0 0.0
        %290 = vmatpush1.msra.mxu0 0.0
        %291 = vmatprep.subr.mxu0 0.0
        %292 = vmatpush1.msra.mxu0 0.0
        %293 = vmatprep.subr.mxu0 0.0
        %294 = vmatpush1.msra.mxu0 0.0
        %295 = vmatprep.subr.mxu0 0.0
        %296 = vmatpush1.msra.mxu0 0.0
        %297 = vmatprep.subr.mxu0 0.0
        %298 = vmatpush1.msra.mxu0 0.0
        %299 = vmatprep.subr.mxu0 0.0
        %300 = vmatpush1.msra.mxu0 0.0
        %301 = vmatprep.subr.mxu0 0.0
        %302 = vmatpush1.msra.mxu0 0.0
        %303 = vmatprep.subr.mxu0 0.0
        %304 = vmatpush1.msra.mxu0 0.0
        %305 = vmatprep.subr.mxu0 0.0
        %306 = vmatpush1.msra.mxu0 0.0
        %307 = vmatprep.subr.mxu0 0.0
        %308 = vmatpush1.msra.mxu0 0.0
        %309 = vmatprep.subr.mxu0 0.0
        %310 = vmatpush1.msra.mxu0 0.0
        %311 = vmatprep.subr.mxu0 0.0
        %312 = vmatpush1.msra.mxu0 0.0
        %313 = vmatprep.subr.mxu0 0.0
        %314 = vmatpush1.msra.mxu0 0.0
        %315 = vmatprep.subr.mxu0 0.0
        %316 = vmatpush1.msra.mxu0 0.0
        %317 = vmatprep.subr.mxu0 0.0
        %318 = vmatpush1.msra.mxu0 0.0
        %319 = vmatprep.subr.mxu0 0.0
        %320 = vmatpush1.msra.mxu0 0.0
        %321 = vmatprep.subr.mxu0 0.0
        %322 = vmatpush1.msra.mxu0 0.0
        %323 = vmatprep.subr.mxu0 0.0
        %324 = vmatpush1.msra.mxu0 0.0
        %325 = vmatprep.subr.mxu0 0.0
        %326 = vmatpush1.msra.mxu0 0.0
        %327 = vmatprep.subr.mxu0 0.0
        %328 = vmatpush1.msra.mxu0 0.0
        %329 = vmatprep.subr.mxu0 0.0
        %330 = vmatpush1.msra.mxu0 0.0
        %331 = vmatprep.subr.mxu0 0.0
        %332 = vmatpush1.msra.mxu0 0.0
        %333 = vmatprep.subr.mxu0 0.0
        %334 = vmatpush1.msra.mxu0 0.0
        %335 = vmatprep.mubr.f32.mxu0 0.0
        %336 = vmatmul.mubr.f32.gmra.mrb[0].mxu0 %v262
        %v337 = vpop.f32.mrb[0].mxu0
        %v338 = vadd.f32 %v258, %v337
        %v339 = vpop.f32.mrb[0].mxu0
        %v340 = vadd.f32 %v258, %v339
        %341 = vdwg.mxu0
        %342 = vst [vmem:[%s223] sm:$0xff] %v338
        %343 = vst [vmem:[%s223 + $0x8] sm:$0xff] %v340
        %s344 = sand.u32 %s128, 1
        %s345 = scalar_lea.sflag [#allocation3], %s344
        %s346 = sand.u32 %s128, 1
        %s347 = smul.addr %s346, 16
        %s348 = scalar_lea.vmem [#allocation2], %s347
        // Predicated region
        $region33: #{tpu_custom_call.1} parent=31 // pred_check
          %p349 = pneg %p138
        $region34: #{tpu_custom_call.1} parent=31 // pred_check_branch
          %351 = sbr.rel (%p349) target = $region36
        $region35: #{tpu_custom_call.1} parent=31 // pred_region
          %s352 = smul.u32 2, %s24
          %s354 = ssub.s32 256, 256
          %355 = vsyncadd %s345, %s354
          %s356 = smul.addr %s23, 2
          %s357 = sadd.s32 %s352, %s356
          %s358 = smul.addr %s22, 2
          %s359 = sadd.s32 %s357, %s358
          %s360 = smul.addr %s359, 128
          %s361 = scalar_lea.hbm %s3, %s360
          %s363 = sshll.u32 %s348, 4
          %s364 = int_to_ptr.vmem [resolvable:$true] %s363
          %366 = dma.vmem_to_hbm [thread:$0]  %s364, 256, %s361, %s345
        $region36: #{tpu_custom_call.1} parent=31 // pred_fallthru
          _
      $region32: #{tpu_custom_call.1} parent=5 // pred_fallthru
        _
      %p367 = scmp.le.s32.totalorder 2, %s12
      // Predicated region
      $region37: #{tpu_custom_call.1} parent=5 // pred_check
        %p368 = pneg %p367
      $region38: #{tpu_custom_call.1} parent=5 // pred_check_branch
        %370 = sbr.rel (%p368) target = $region40
      $region39: #{tpu_custom_call.1} parent=5 // pred_region
        %s371 = ssub.s32 %s12, 2
        // Predicated region
        $region41: #{tpu_custom_call.1} parent=39 // pred_check
          %p372 = pneg %p144
        $region42: #{tpu_custom_call.1} parent=39 // pred_check_branch
          %374 = sbr.rel (%p372) target = $region44
        $region43: #{tpu_custom_call.1} parent=39 // pred_region
          %s375 = sand.u32 %s129, 1
          %s376 = scalar_lea.sflag [#allocation3], %s375
          %s377 = sand.u32 %s129, 1
          %s378 = smul.addr %s377, 16
          %s379 = scalar_lea.vmem [#allocation2], %s378
          %380 = dma.done %s376, 256
        $region44: #{tpu_custom_call.1} parent=39 // pred_fallthru
          _
      $region40: #{tpu_custom_call.1} parent=5 // pred_fallthru
        _
    $region6: #{tpu_custom_call.1} parent=1 // loop_footer
      %s16 = sadd.s32 1, %s12
    $region7: #{tpu_custom_call.1} parent=1 // loop_footer_branch
      %11 = sbr.rel target = $region3
    $region8: #{tpu_custom_call.1} parent=1 // loop_exit
      _
    %381 = vsyncpa [#allocation3], 1
    %s382 = scalar_lea.sflag [#allocation3], 1
    %383 = vsyncpa %s382, 1

</llo_original>
